<compile_context>
chip_gen: v7x
topology: tpu7x:2x2x1
jax: 0.10.0
libtpu: 0.0.40
codegen_flags: <defaults>
</compile_context>

<pallas_src>
import functools

import jax
import jax.numpy as jnp
from jax.experimental import pallas as pl
from jax.experimental.pallas import tpu as pltpu


# --------------------------------------------------------------------------
# Fused whole-model kernel (single gridless invocation, everything in VMEM).
# --------------------------------------------------------------------------
def _fused_gcn_kernel(num_layers, pooling_type, num_graphs, feat_dim, douts,
                      x_ref, adj_ref, pool_ref, *refs):
    """refs layout: (w_0, ..., w_{L-1}, fc_w, b_all, o_ref)."""
    w_refs = refs[:num_layers]
    fc_w_ref = refs[num_layers]
    b_all_ref = refs[num_layers + 1]
    o_ref = refs[num_layers + 2]

    # D^-1/2 (with self-loops) rides in the zero-padded feature columns of x
    # (column `feat_dim`); the matching first-layer weight rows are zero, so it
    # never contributes to X W.
    dinv = x_ref[:, feat_dim:feat_dim + 1]                      # [N, 1] f32

    adj = adj_ref[...]                                          # bf16, exact counts
    h = x_ref[...]                                              # [N, Dpad] f32

    # ---- GCNConv -> (folded BN) -> ReLU stack ------------------------------
    boff = 0
    for l in range(num_layers):
        w = w_refs[l][...]                                      # bf16 [Din(_pad), Dout]
        dout = douts[l]
        b = b_all_ref[:, boff:boff + dout]                      # f32  [1, Dout]
        boff += dout
        xw = jnp.dot(h.astype(jnp.bfloat16), w,
                     preferred_element_type=jnp.float32)        # [N, Dout]
        # Symmetric GCN normalization folded into the f32 activations:
        #   D^-1/2 (A+I) D^-1/2 X W == dinv * (A_raw @ (dinv * (X W)))
        agg = dinv * jnp.dot(adj, (dinv * xw).astype(jnp.bfloat16),
                             preferred_element_type=jnp.float32)  # [N, Dout]
        h = jnp.maximum(agg + b, 0.0)                           # ReLU
        # dropout(p) is identity at inference time.

    # ---- global pooling ----------------------------------------------------
    if pooling_type in ("add", "mean"):
        pool = pool_ref[...]                                    # [G, N] f32 (graph-major)
        pooled = jnp.dot(pool, h, preferred_element_type=jnp.float32)  # [G, D]
        if pooling_type == "mean":
            cnt = jnp.sum(pool, axis=1, keepdims=True)          # [G, 1]
            pooled = pooled / jnp.maximum(cnt, 1.0)             # exact division
    else:  # "max": pool is node-major [N, G] so masks stay column-shaped
        pool = pool_ref[...]
        rows = []
        for g in range(num_graphs):                             # G is small & static
            m = pool[:, g:g + 1]                                # [N, 1]
            masked = jnp.where(m > 0, h, jnp.float32(-3e38))
            rows.append(jnp.max(masked, axis=0, keepdims=True))
        pooled = jnp.concatenate(rows, axis=0)                  # [G, D]

    # ---- fc + sigmoid -------------------------------------------------------
    logits = jnp.dot(pooled, fc_w_ref[...],
                     preferred_element_type=jnp.float32)        # [G, 1]
    logits = logits + b_all_ref[:, boff:boff + 1]               # fc bias
    o_ref[...] = jax.nn.sigmoid(logits)


# --------------------------------------------------------------------------
# Parameters (matching the PyTorch module in eval mode).
# --------------------------------------------------------------------------
def make_params(key, input_dim, hidden_channels, use_batch_norm):
    dims = [input_dim] + list(hidden_channels)

    def glorot(k, shape):
        fan_in, fan_out = shape
        lim = (6.0 / (fan_in + fan_out)) ** 0.5
        return jax.random.uniform(k, shape, jnp.float32, -lim, lim)

    params = {"layers": []}
    for i in range(len(hidden_channels)):
        din, dout = dims[i], dims[i + 1]
        key, kw = jax.random.split(key)
        layer = {"w": glorot(kw, (din, dout)),
                 "b": jnp.zeros((1, dout), jnp.float32)}
        if use_batch_norm:
            key, kg, kb, km, kv = jax.random.split(key, 5)
            layer["bn_gamma"] = jax.random.uniform(kg, (dout,), jnp.float32, 0.5, 1.5)
            layer["bn_beta"] = 0.1 * jax.random.normal(kb, (dout,), jnp.float32)
            layer["bn_mean"] = 0.1 * jax.random.normal(km, (dout,), jnp.float32)
            layer["bn_var"] = jax.random.uniform(kv, (dout,), jnp.float32, 0.5, 1.5)
        params["layers"].append(layer)

    key, kf = jax.random.split(key)
    params["fc_w"] = glorot(kf, (hidden_channels[-1], 1))
    params["fc_b"] = jnp.zeros((1, 1), jnp.float32)
    return params


def _fold_batch_norm(w, b, gamma, beta, mean, var, eps=1e-5):
    # Eval-mode BatchNorm1d folded into the preceding GCNConv weight/bias:
    # scale*(A X W + b) + shift == A X (W*scale) + (b*scale + shift).
    scale = gamma / jnp.sqrt(var + eps)                         # [Dout]
    shift = beta - mean * scale
    return w * scale[None, :], b * scale[None, :] + shift[None, :]


# --------------------------------------------------------------------------
# Forward wrapper: dense adjacency, normalization vector, packing, one call.
# --------------------------------------------------------------------------
def model_forward(params, x, edge_index, batch, num_graphs, *,
                  pooling_type="add", use_batch_norm=False):
    n, din = x.shape
    num_layers = len(params["layers"])
    douts = tuple(int(l["w"].shape[1]) for l in params["layers"])

    # Dense adjacency adj[target, source] with PyG GCNConv semantics:
    # scatter-ADD duplicate edges, then add_remaining_self_loops.
    adj = jnp.zeros((n, n), jnp.float32)
    adj = adj.at[edge_index[1], edge_index[0]].add(1.0)
    idx = jnp.arange(n)
    diag = adj[idx, idx]
    adj = adj.at[idx, idx].set(jnp.where(diag > 0.0, diag, 1.0))
    deg = jnp.sum(adj, axis=1, keepdims=True)                   # [N, 1] (>= 1)
    dinv = jnp.where(deg > 0.0, deg ** -0.5, 0.0)               # exact f32 D^-1/2
    adj_bf = adj.astype(jnp.bfloat16)                           # small ints -> exact

    # Pack [x | dinv | zero pad] into one f32 slab, last dim multiple of 16
    # (bf16 sublane pack for the MXU contraction dim).
    width = din + 1
    pad = (-width) % 16
    pieces = [x, dinv]
    if pad:
        pieces.append(jnp.zeros((n, pad), jnp.float32))
    x_pack = jnp.concatenate(pieces, axis=1)                    # [N, Dpad]
    din_pad = width + pad

    # Pooling matrix: graph-major [G, N] for add/mean (plain matmul in-kernel),
    # node-major [N, G] for max (column masks).
    onehot = (batch[:, None] == jnp.arange(num_graphs)[None, :]).astype(jnp.float32)
    pool = onehot if pooling_type == "max" else onehot.T

    # Weights (BN folded, first layer zero-padded to Dpad rows) + one bias slab.
    ws, bs = [], []
    for i, lyr in enumerate(params["layers"]):
        w, b = lyr["w"], lyr["b"]
        if use_batch_norm:
            w, b = _fold_batch_norm(w, b, lyr["bn_gamma"], lyr["bn_beta"],
                                    lyr["bn_mean"], lyr["bn_var"])
        if i == 0:
            w = jnp.pad(w, ((0, din_pad - din), (0, 0)))        # zero rows: dinv + pad
        ws.append(w.astype(jnp.bfloat16))
        bs.append(b.reshape(1, -1).astype(jnp.float32))
    b_all = jnp.concatenate(bs + [params["fc_b"].reshape(1, 1).astype(jnp.float32)],
                            axis=1)                             # [1, sum(Dout)+1]

    flat = [x_pack, adj_bf, pool] + ws + [params["fc_w"].astype(jnp.float32), b_all]

    kernel = functools.partial(_fused_gcn_kernel, num_layers, pooling_type,
                               num_graphs, din, douts)
    vmem = pl.BlockSpec(memory_space=pltpu.MemorySpace.VMEM)
    return pl.pallas_call(
        kernel,
        out_shape=jax.ShapeDtypeStruct((num_graphs, 1), jnp.float32),
        in_specs=[vmem] * len(flat),
        out_specs=vmem,
    )(*flat)


if __name__ == "__main__":
    key = jax.random.PRNGKey(0)

    # Small shapes consistent with the module:
    # DynamicGraphBinaryClassificationModel(input_dim=29,
    #     hidden_channels=[32, 32, 16], dropout=0.2,
    #     pooling_type='add', use_batch_norm=True), eval mode.
    N, INPUT_DIM = 16, 29
    HIDDEN_CHANNELS = [32, 32, 16]
    NUM_GRAPHS, E = 2, 40
    POOLING_TYPE = "add"
    USE_BATCH_NORM = True

    key, kx, ks, kd = jax.random.split(key, 4)
    x = jax.random.normal(kx, (N, INPUT_DIM), jnp.float32)
    src = jax.random.randint(ks, (E,), 0, N)
    dst = jax.random.randint(kd, (E,), 0, N)
    edge_index = jnp.stack([src, dst]).astype(jnp.int32)              # [2, E]
    batch = jnp.repeat(jnp.arange(NUM_GRAPHS), N // NUM_GRAPHS)       # [N]

    key, kp = jax.random.split(key)
    params = make_params(kp, INPUT_DIM, HIDDEN_CHANNELS, USE_BATCH_NORM)

    out = model_forward(params, x, edge_index, batch, NUM_GRAPHS,
                        pooling_type=POOLING_TYPE,
                        use_batch_norm=USE_BATCH_NORM)
    out = jax.block_until_ready(out)
    assert out.shape == (NUM_GRAPHS, 1)
    assert bool(jnp.all((out >= 0.0) & (out <= 1.0)))
    print("KERNEL_OK")
</pallas_src>

<mosaic_0001>
module attributes {stable_mosaic.version = 11 : i64} {
  func.func @_fused_gcn_kernel(%arg0: memref<16x32xf32, #tpu.memory_space<vmem>>, %arg1: memref<16x16xbf16, #tpu.memory_space<vmem>>, %arg2: memref<2x16xf32, #tpu.memory_space<vmem>>, %arg3: memref<32x32xbf16, #tpu.memory_space<vmem>>, %arg4: memref<32x32xbf16, #tpu.memory_space<vmem>>, %arg5: memref<32x16xbf16, #tpu.memory_space<vmem>>, %arg6: memref<16x1xf32, #tpu.memory_space<vmem>>, %arg7: memref<1x81xf32, #tpu.memory_space<vmem>>, %arg8: memref<2x1xf32, #tpu.memory_space<vmem>>) attributes {dimension_semantics = [], scalar_prefetch = 0 : i64, scratch_operands = 0 : i64, tpu.core_type = #tpu.core_type<tc>} {
    %c0 = arith.constant 0 : index
    %c29 = arith.constant 29 : index
    %0 = vector.load %arg0[%c0, %c29] : memref<16x32xf32, #tpu.memory_space<vmem>>, vector<16x1xf32>
    %c0_0 = arith.constant 0 : index
    %c0_1 = arith.constant 0 : index
    %1 = vector.load %arg1[%c0_0, %c0_1] : memref<16x16xbf16, #tpu.memory_space<vmem>>, vector<16x16xbf16>
    %c0_2 = arith.constant 0 : index
    %c0_3 = arith.constant 0 : index
    %2 = vector.load %arg0[%c0_2, %c0_3] : memref<16x32xf32, #tpu.memory_space<vmem>>, vector<16x32xf32>
    %c0_4 = arith.constant 0 : index
    %c0_5 = arith.constant 0 : index
    %3 = vector.load %arg3[%c0_4, %c0_5] : memref<32x32xbf16, #tpu.memory_space<vmem>>, vector<32x32xbf16>
    %c0_6 = arith.constant 0 : index
    %c0_7 = arith.constant 0 : index
    %4 = vector.load %arg7[%c0_6, %c0_7] : memref<1x81xf32, #tpu.memory_space<vmem>>, vector<1x32xf32>
    %5 = arith.truncf %2 : vector<16x32xf32> to vector<16x32xbf16>
    %cst = arith.constant dense<0.000000e+00> : vector<16x32xf32>
    %6 = tpu.matmul %5, %3, %cst {dimension_numbers = #tpu.dot_dimension_numbers<[1], [0], [0], [1], [0, 0, 1, 1], [], []>} : vector<16x32xbf16>, vector<32x32xbf16>, vector<16x32xf32> -> vector<16x32xf32>
    %7 = vector.broadcast %0 : vector<16x1xf32> to vector<16x32xf32>
    %8 = arith.mulf %7, %6 : vector<16x32xf32>
    %9 = arith.truncf %8 : vector<16x32xf32> to vector<16x32xbf16>
    %cst_8 = arith.constant dense<0.000000e+00> : vector<16x32xf32>
    %10 = tpu.matmul %1, %9, %cst_8 {dimension_numbers = #tpu.dot_dimension_numbers<[1], [0], [0], [1], [0, 0, 1, 1], [], []>} : vector<16x16xbf16>, vector<16x32xbf16>, vector<16x32xf32> -> vector<16x32xf32>
    %11 = vector.broadcast %0 : vector<16x1xf32> to vector<16x32xf32>
    %12 = arith.mulf %11, %10 : vector<16x32xf32>
    %13 = vector.broadcast %4 : vector<1x32xf32> to vector<16x32xf32>
    %14 = arith.addf %12, %13 : vector<16x32xf32>
    %cst_9 = arith.constant 0.000000e+00 : f32
    %15 = vector.broadcast %cst_9 : f32 to vector<16x32xf32>
    %16 = arith.maximumf %14, %15 : vector<16x32xf32>
    %c0_10 = arith.constant 0 : index
    %c0_11 = arith.constant 0 : index
    %17 = vector.load %arg4[%c0_10, %c0_11] : memref<32x32xbf16, #tpu.memory_space<vmem>>, vector<32x32xbf16>
    %c0_12 = arith.constant 0 : index
    %c32 = arith.constant 32 : index
    %18 = vector.load %arg7[%c0_12, %c32] : memref<1x81xf32, #tpu.memory_space<vmem>>, vector<1x32xf32>
    %19 = arith.truncf %16 : vector<16x32xf32> to vector<16x32xbf16>
    %cst_13 = arith.constant dense<0.000000e+00> : vector<16x32xf32>
    %20 = tpu.matmul %19, %17, %cst_13 {dimension_numbers = #tpu.dot_dimension_numbers<[1], [0], [0], [1], [0, 0, 1, 1], [], []>} : vector<16x32xbf16>, vector<32x32xbf16>, vector<16x32xf32> -> vector<16x32xf32>
    %21 = vector.broadcast %0 : vector<16x1xf32> to vector<16x32xf32>
    %22 = arith.mulf %21, %20 : vector<16x32xf32>
    %23 = arith.truncf %22 : vector<16x32xf32> to vector<16x32xbf16>
    %cst_14 = arith.constant dense<0.000000e+00> : vector<16x32xf32>
    %24 = tpu.matmul %1, %23, %cst_14 {dimension_numbers = #tpu.dot_dimension_numbers<[1], [0], [0], [1], [0, 0, 1, 1], [], []>} : vector<16x16xbf16>, vector<16x32xbf16>, vector<16x32xf32> -> vector<16x32xf32>
    %25 = vector.broadcast %0 : vector<16x1xf32> to vector<16x32xf32>
    %26 = arith.mulf %25, %24 : vector<16x32xf32>
    %27 = vector.broadcast %18 : vector<1x32xf32> to vector<16x32xf32>
    %28 = arith.addf %26, %27 : vector<16x32xf32>
    %cst_15 = arith.constant 0.000000e+00 : f32
    %29 = vector.broadcast %cst_15 : f32 to vector<16x32xf32>
    %30 = arith.maximumf %28, %29 : vector<16x32xf32>
    %c0_16 = arith.constant 0 : index
    %c0_17 = arith.constant 0 : index
    %31 = vector.load %arg5[%c0_16, %c0_17] : memref<32x16xbf16, #tpu.memory_space<vmem>>, vector<32x16xbf16>
    %c0_18 = arith.constant 0 : index
    %c64 = arith.constant 64 : index
    %32 = vector.load %arg7[%c0_18, %c64] : memref<1x81xf32, #tpu.memory_space<vmem>>, vector<1x16xf32>
    %33 = arith.truncf %30 : vector<16x32xf32> to vector<16x32xbf16>
    %cst_19 = arith.constant dense<0.000000e+00> : vector<16x16xf32>
    %34 = tpu.matmul %33, %31, %cst_19 {dimension_numbers = #tpu.dot_dimension_numbers<[1], [0], [0], [1], [0, 0, 1, 1], [], []>} : vector<16x32xbf16>, vector<32x16xbf16>, vector<16x16xf32> -> vector<16x16xf32>
    %35 = vector.broadcast %0 : vector<16x1xf32> to vector<16x16xf32>
    %36 = arith.mulf %35, %34 : vector<16x16xf32>
    %37 = arith.truncf %36 : vector<16x16xf32> to vector<16x16xbf16>
    %cst_20 = arith.constant dense<0.000000e+00> : vector<16x16xf32>
    %38 = tpu.matmul %1, %37, %cst_20 {dimension_numbers = #tpu.dot_dimension_numbers<[1], [0], [0], [1], [0, 0, 1, 1], [], []>} : vector<16x16xbf16>, vector<16x16xbf16>, vector<16x16xf32> -> vector<16x16xf32>
    %39 = vector.broadcast %0 : vector<16x1xf32> to vector<16x16xf32>
    %40 = arith.mulf %39, %38 : vector<16x16xf32>
    %41 = vector.broadcast %32 : vector<1x16xf32> to vector<16x16xf32>
    %42 = arith.addf %40, %41 : vector<16x16xf32>
    %cst_21 = arith.constant 0.000000e+00 : f32
    %43 = vector.broadcast %cst_21 : f32 to vector<16x16xf32>
    %44 = arith.maximumf %42, %43 : vector<16x16xf32>
    %c0_22 = arith.constant 0 : index
    %c0_23 = arith.constant 0 : index
    %45 = vector.load %arg2[%c0_22, %c0_23] : memref<2x16xf32, #tpu.memory_space<vmem>>, vector<2x16xf32>
    %cst_24 = arith.constant dense<0.000000e+00> : vector<2x16xf32>
    %46 = tpu.matmul %45, %44, %cst_24 {dimension_numbers = #tpu.dot_dimension_numbers<[1], [0], [0], [1], [0, 0, 1, 1], [], []>} : vector<2x16xf32>, vector<16x16xf32>, vector<2x16xf32> -> vector<2x16xf32>
    %c0_25 = arith.constant 0 : index
    %c0_26 = arith.constant 0 : index
    %47 = vector.load %arg6[%c0_25, %c0_26] : memref<16x1xf32, #tpu.memory_space<vmem>>, vector<16x1xf32>
    %cst_27 = arith.constant dense<0.000000e+00> : vector<2x1xf32>
    %48 = tpu.matmul %46, %47, %cst_27 {dimension_numbers = #tpu.dot_dimension_numbers<[1], [0], [0], [1], [0, 0, 1, 1], [], []>} : vector<2x16xf32>, vector<16x1xf32>, vector<2x1xf32> -> vector<2x1xf32>
    %c0_28 = arith.constant 0 : index
    %c80 = arith.constant 80 : index
    %49 = vector.load %arg7[%c0_28, %c80] : memref<1x81xf32, #tpu.memory_space<vmem>>, vector<1x1xf32>
    %50 = vector.broadcast %49 : vector<1x1xf32> to vector<2x1xf32>
    %51 = arith.addf %48, %50 : vector<2x1xf32>
    %52 = arith.negf %51 : vector<2x1xf32>
    %53 = math.exp %52 : vector<2x1xf32>
    %cst_29 = arith.constant 1.000000e+00 : f32
    %54 = vector.broadcast %cst_29 : f32 to vector<2x1xf32>
    %55 = arith.addf %54, %53 : vector<2x1xf32>
    %56 = arith.divf %54, %55 : vector<2x1xf32>
    %c0_30 = arith.constant 0 : index
    %c0_31 = arith.constant 0 : index
    %57 = vector.load %arg8[%c0_30, %c0_31] : memref<2x1xf32, #tpu.memory_space<vmem>>, vector<2x1xf32>
    tpu.vector_store %arg8[%c0_30, %c0_31], %56 {strides = array<i32>} : memref<2x1xf32, #tpu.memory_space<vmem>>, vector<2x1xf32>,
    return
  }
}

</mosaic_0001>

<llo_original>
// kernel: tpu_custom_call.1
$region0: #{tpu_custom_call.1}
  #allocation0 [shape = 'u32[]', space=smem, size = 0x4, offset = 0x4, fixed_abs, tag = 'smem constant byte address 0x4 - core index']
  #allocation1 [shape = 'u32[144,128]{1,0:T(1,128)}', space=vmem, size = 0x12000, scoped, tag = 'internal scratch']
  %s0 = inlined_call_operand.vmem [shape: f32[16,32], index: 0, kind: input, shape index: {}]
  %s1 = inlined_call_operand.hbm [shape: bf16[16,16], index: 1, kind: input, shape index: {}]
  %s2 = inlined_call_operand.hbm [shape: f32[2,16], index: 2, kind: input, shape index: {}]
  %s3 = inlined_call_operand.vmem [shape: bf16[32,32], index: 3, kind: input, shape index: {}]
  %s4 = inlined_call_operand.vmem [shape: bf16[32,32], index: 4, kind: input, shape index: {}]
  %s5 = inlined_call_operand.vmem [shape: bf16[32,16], index: 5, kind: input, shape index: {}]
  %s6 = inlined_call_operand.vmem [shape: f32[16,1], index: 6, kind: input, shape index: {}]
  %s7 = inlined_call_operand.vmem [shape: f32[1,81], index: 7, kind: input, shape index: {}]
  %s8 = inlined_call_operand.vmem [shape: f32[2,1], index: 8, kind: output, shape index: {}]
  %s9 = sld [smem:[#allocation0]]
  $region50: #{tpu_custom_call.1} parent=0
    _
  %s11 = ssub.s32 1, %s9
  %s12 = scalar_select 0, %s11, %s9
  $region1: #{tpu_custom_call.1} parent=0
    #allocation2 [shape = 'u8[4096]{0}', space=vmem, size = 0x1000, scoped, tag = 'input window, operand 1, single buffered']
    #allocation3 [shape = 's32[1]{0}', space=sflag, size = 0x4, scoped, tag = 'scoped memory for tpu_custom_call.1']
    #allocation4 [shape = 'u8[1024]{0}', space=vmem, size = 0x400, scoped, tag = 'input window, operand 2, single buffered']
    #allocation5 [shape = 's32[1]{0}', space=sflag, size = 0x4, scoped, tag = 'scoped memory for tpu_custom_call.1']
    %13 = vsyncpa [#allocation3], 0
    %14 = vsyncpa [#allocation5], 0
    // Predicated region
    $region2: #{tpu_custom_call.1} parent=1 // pred_check
      _
    $region3: #{tpu_custom_call.1} parent=1 // pred_check_branch
      %16 = sbr.rel (0) target = $region5
    $region4: #{tpu_custom_call.1} parent=1 // pred_region
      _
    $region5: #{tpu_custom_call.1} parent=1 // pred_fallthru
      _
    // Predicated region
    $region6: #{tpu_custom_call.1} parent=1 // pred_check
      _
    $region7: #{tpu_custom_call.1} parent=1 // pred_check_branch
      %18 = sbr.rel (0) target = $region9
    $region8: #{tpu_custom_call.1} parent=1 // pred_region
      %s20 = ssub.s32 128, 128
      %21 = vsyncadd [#allocation3], %s20
      %s22 = sshll.u32 [#allocation2], 4
      %s23 = int_to_ptr.vmem [resolvable:$true] %s22
      %28 = dma.hbm_to_vmem [thread:$0]  %s1, 128, %s23, [#allocation3], 64, 64, 4
    $region9: #{tpu_custom_call.1} parent=1 // pred_fallthru
      _
    // Predicated region
    $region10: #{tpu_custom_call.1} parent=1 // pred_check
      _
    $region11: #{tpu_custom_call.1} parent=1 // pred_check_branch
      %30 = sbr.rel (0) target = $region13
    $region12: #{tpu_custom_call.1} parent=1 // pred_region
      %s32 = ssub.s32 32, 32
      %33 = vsyncadd [#allocation5], %s32
      %s35 = sshll.u32 [#allocation4], 4
      %s36 = int_to_ptr.vmem [resolvable:$true] %s35
      %38 = dma.hbm_to_vmem [thread:$0]  %s2, 32, %s36, [#allocation5]
    $region13: #{tpu_custom_call.1} parent=1 // pred_fallthru
      _
    // Predicated region
    $region14: #{tpu_custom_call.1} parent=1 // pred_check
      _
    $region15: #{tpu_custom_call.1} parent=1 // pred_check_branch
      %40 = sbr.rel (0) target = $region17
    $region16: #{tpu_custom_call.1} parent=1 // pred_region
      _
    $region17: #{tpu_custom_call.1} parent=1 // pred_fallthru
      _
    // Predicated region
    $region18: #{tpu_custom_call.1} parent=1 // pred_check
      _
    $region19: #{tpu_custom_call.1} parent=1 // pred_check_branch
      %42 = sbr.rel (0) target = $region21
    $region20: #{tpu_custom_call.1} parent=1 // pred_region
      _
    $region21: #{tpu_custom_call.1} parent=1 // pred_fallthru
      _
    // Predicated region
    $region22: #{tpu_custom_call.1} parent=1 // pred_check
      _
    $region23: #{tpu_custom_call.1} parent=1 // pred_check_branch
      %44 = sbr.rel (0) target = $region25
    $region24: #{tpu_custom_call.1} parent=1 // pred_region
      _
    $region25: #{tpu_custom_call.1} parent=1 // pred_fallthru
      _
    // Predicated region
    $region26: #{tpu_custom_call.1} parent=1 // pred_check
      _
    $region27: #{tpu_custom_call.1} parent=1 // pred_check_branch
      %46 = sbr.rel (0) target = $region29
    $region28: #{tpu_custom_call.1} parent=1 // pred_region
      _
    $region29: #{tpu_custom_call.1} parent=1 // pred_fallthru
      _
    // Predicated region
    $region30: #{tpu_custom_call.1} parent=1 // pred_check
      _
    $region31: #{tpu_custom_call.1} parent=1 // pred_check_branch
      %48 = sbr.rel (0) target = $region33
    $region32: #{tpu_custom_call.1} parent=1 // pred_region
      _
    $region33: #{tpu_custom_call.1} parent=1 // pred_fallthru
      _
    // Predicated region
    $region34: #{tpu_custom_call.1} parent=1 // pred_check
      _
    $region35: #{tpu_custom_call.1} parent=1 // pred_check_branch
      %50 = sbr.rel (0) target = $region37
    $region36: #{tpu_custom_call.1} parent=1 // pred_region
      %51 = dma.done [#allocation3], 128
    $region37: #{tpu_custom_call.1} parent=1 // pred_fallthru
      _
    // Predicated region
    $region38: #{tpu_custom_call.1} parent=1 // pred_check
      _
    $region39: #{tpu_custom_call.1} parent=1 // pred_check_branch
      %53 = sbr.rel (0) target = $region41
    $region40: #{tpu_custom_call.1} parent=1 // pred_region
      %54 = dma.done [#allocation5], 32
    $region41: #{tpu_custom_call.1} parent=1 // pred_fallthru
      _
    %v56 = vld [vmem:[%s0] sm:$0xff]
    %v57 = vld [vmem:[%s0 + $0x8] sm:$0xff]
    %v58 = vld [vmem:[#allocation2] sm:$0xf]
    %v59 = vld [vmem:[#allocation2 + $0x4] sm:$0xf]
    %v60 = vld [vmem:[%s3] sm:$0xf]
    %v61 = vld [vmem:[%s3 + $0x4] sm:$0xf]
    %v62 = vld [vmem:[%s3 + $0x8] sm:$0xf]
    %v63 = vld [vmem:[%s3 + $0xc] sm:$0xf]
    %v64 = vld [vmem:[%s7] sm:$0x1]
    %v65 = vpack.c.bf16 %v57, %v56
    %v70 = vunpack.c.l.b16 %v60
    %v71 = vunpack.c.l.b16 %v61
    %v72 = vunpack.c.l.b16 %v62
    %v73 = vunpack.c.l.b16 %v63
    %v74 = vpack.c.b16 %v71, %v70
    %v75 = vpack.c.b16 %v73, %v72
    %vm78 = vcmask 261120
    %v80 = vsel %vm78, %v65, 0
    %82 = vmatprep.subr.bf16.mxu0 0
    %83 = vmatpush1.bf16.msra.mxu0 %v74
    %84 = vmatprep.subr.bf16.mxu0 0
    %85 = vmatpush1.bf16.msra.mxu0 %v75
    %86 = vmatprep.subr.bf16.mxu0 0
    %87 = vmatpush1.bf16.msra.mxu0 0
    %88 = vmatprep.subr.bf16.mxu0 0
    %89 = vmatpush1.bf16.msra.mxu0 0
    %90 = vmatprep.subr.bf16.mxu0 0
    %91 = vmatpush1.bf16.msra.mxu0 0
    %92 = vmatprep.subr.bf16.mxu0 0
    %93 = vmatpush1.bf16.msra.mxu0 0
    %94 = vmatprep.subr.bf16.mxu0 0
    %95 = vmatpush1.bf16.msra.mxu0 0
    %96 = vmatprep.subr.bf16.mxu0 0
    %97 = vmatpush1.bf16.msra.mxu0 0
    %98 = vmatprep.subr.bf16.mxu0 0
    %99 = vmatpush1.bf16.msra.mxu0 0
    %100 = vmatprep.subr.bf16.mxu0 0
    %101 = vmatpush1.bf16.msra.mxu0 0
    %102 = vmatprep.subr.bf16.mxu0 0
    %103 = vmatpush1.bf16.msra.mxu0 0
    %104 = vmatprep.subr.bf16.mxu0 0
    %105 = vmatpush1.bf16.msra.mxu0 0
    %106 = vmatprep.subr.bf16.mxu0 0
    %107 = vmatpush1.bf16.msra.mxu0 0
    %108 = vmatprep.subr.bf16.mxu0 0
    %109 = vmatpush1.bf16.msra.mxu0 0
    %110 = vmatprep.subr.bf16.mxu0 0
    %111 = vmatpush1.bf16.msra.mxu0 0
    %112 = vmatprep.subr.bf16.mxu0 0
    %113 = vmatpush1.bf16.msra.mxu0 0
    %114 = vmatprep.mubr.bf16.mxu0 0
    %115 = vmatmul.mubr.bf16.gmra.mrb[0].mxu0 %v80
    %v116 = vpop.f32.mrb[0].mxu0
    %v117 = vadd.f32 0.0, %v116
    %v118 = vpop.f32.mrb[0].mxu0
    %v119 = vpop.f32.mrb[0].mxu0
    %v120 = vadd.f32 0.0, %v119
    %v121 = vpop.f32.mrb[0].mxu0
    %122 = vdwg.mxu0
    %124 = vset.pattern.permute.xlu0 29
    %125 = vperm.xlu0 %124, %v56
    %v126 = vpop.permute.xlu0 %125
    %129 = vset.pattern.permute.xlu0 29
    %130 = vperm.xlu0 %129, %v57
    %v131 = vpop.permute.xlu0 %130
    %v133 = vmul.f32 %v126, %v117
    %v134 = vmul.f32 %v131, %v120
    %v135 = vpack.c.bf16 %v134, %v133
    %v138 = vunpack.c.l.b16 %v58
    %v139 = vunpack.c.l.b16 %v59
    %v140 = vpack.c.b16 %v139, %v138
    %vm141 = vcmask 130048
    %v143 = vsel %vm141, %v140, 0
    %145 = vmatprep.subr.bf16.mxu0 0
    %146 = vmatpush1.bf16.msra.mxu0 %v135
    %147 = vmatprep.subr.bf16.mxu0 0
    %148 = vmatpush1.bf16.msra.mxu0 0
    %149 = vmatprep.subr.bf16.mxu0 0
    %150 = vmatpush1.bf16.msra.mxu0 0
    %151 = vmatprep.subr.bf16.mxu0 0
    %152 = vmatpush1.bf16.msra.mxu0 0
    %153 = vmatprep.subr.bf16.mxu0 0
    %154 = vmatpush1.bf16.msra.mxu0 0
    %155 = vmatprep.subr.bf16.mxu0 0
    %156 = vmatpush1.bf16.msra.mxu0 0
    %157 = vmatprep.subr.bf16.mxu0 0
    %158 = vmatpush1.bf16.msra.mxu0 0
    %159 = vmatprep.subr.bf16.mxu0 0
    %160 = vmatpush1.bf16.msra.mxu0 0
    %161 = vmatprep.subr.bf16.mxu0 0
    %162 = vmatpush1.bf16.msra.mxu0 0
    %163 = vmatprep.subr.bf16.mxu0 0
    %164 = vmatpush1.bf16.msra.mxu0 0
    %165 = vmatprep.subr.bf16.mxu0 0
    %166 = vmatpush1.bf16.msra.mxu0 0
    %167 = vmatprep.subr.bf16.mxu0 0
    %168 = vmatpush1.bf16.msra.mxu0 0
    %169 = vmatprep.subr.bf16.mxu0 0
    %170 = vmatpush1.bf16.msra.mxu0 0
    %171 = vmatprep.subr.bf16.mxu0 0
    %172 = vmatpush1.bf16.msra.mxu0 0
    %173 = vmatprep.subr.bf16.mxu0 0
    %174 = vmatpush1.bf16.msra.mxu0 0
    %175 = vmatprep.subr.bf16.mxu0 0
    %176 = vmatpush1.bf16.msra.mxu0 0
    %177 = vmatprep.mubr.bf16.mxu0 0
    %178 = vmatmul.mubr.bf16.gmra.mrb[0].mxu0 %v143
    %v179 = vpop.f32.mrb[0].mxu0
    %v180 = vadd.f32 0.0, %v179
    %v181 = vpop.f32.mrb[0].mxu0
    %v182 = vpop.f32.mrb[0].mxu0
    %v183 = vadd.f32 0.0, %v182
    %v184 = vpop.f32.mrb[0].mxu0
    %185 = vdwg.mxu0
    %v186 = vmul.f32 %v126, %v180
    %v187 = vmul.f32 %v131, %v183
    %v189 = vlaneseq
    %v190 = vshrl.u32 %v189, 7
    %v191 = vsub.s32 0, %v190
    %v192 = vrot.slane %v64, %v191
    %v194 = vadd.f32 %v186, %v192
    %v195 = vadd.f32 %v187, %v192
    %v196 = vmax.f32 %v194, 0.0
    %v197 = vmax.f32 %v195, 0.0
    %v198 = vld [vmem:[%s4] sm:$0xf]
    %v199 = vld [vmem:[%s4 + $0x4] sm:$0xf]
    %v200 = vld [vmem:[%s4 + $0x8] sm:$0xf]
    %v201 = vld [vmem:[%s4 + $0xc] sm:$0xf]
    %v202 = vpack.c.bf16 %v197, %v196
    %v207 = vunpack.c.l.b16 %v198
    %v208 = vunpack.c.l.b16 %v199
    %v209 = vunpack.c.l.b16 %v200
    %v210 = vunpack.c.l.b16 %v201
    %v211 = vpack.c.b16 %v208, %v207
    %v212 = vpack.c.b16 %v210, %v209
    %v216 = vsel %vm78, %v202, 0
    %218 = vmatprep.subr.bf16.mxu0 0
    %219 = vmatpush1.bf16.msra.mxu0 %v211
    %220 = vmatprep.subr.bf16.mxu0 0
    %221 = vmatpush1.bf16.msra.mxu0 %v212
    %222 = vmatprep.subr.bf16.mxu0 0
    %223 = vmatpush1.bf16.msra.mxu0 0
    %224 = vmatprep.subr.bf16.mxu0 0
    %225 = vmatpush1.bf16.msra.mxu0 0
    %226 = vmatprep.subr.bf16.mxu0 0
    %227 = vmatpush1.bf16.msra.mxu0 0
    %228 = vmatprep.subr.bf16.mxu0 0
    %229 = vmatpush1.bf16.msra.mxu0 0
    %230 = vmatprep.subr.bf16.mxu0 0
    %231 = vmatpush1.bf16.msra.mxu0 0
    %232 = vmatprep.subr.bf16.mxu0 0
    %233 = vmatpush1.bf16.msra.mxu0 0
    %234 = vmatprep.subr.bf16.mxu0 0
    %235 = vmatpush1.bf16.msra.mxu0 0
    %236 = vmatprep.subr.bf16.mxu0 0
    %237 = vmatpush1.bf16.msra.mxu0 0
    %238 = vmatprep.subr.bf16.mxu0 0
    %239 = vmatpush1.bf16.msra.mxu0 0
    %240 = vmatprep.subr.bf16.mxu0 0
    %241 = vmatpush1.bf16.msra.mxu0 0
    %242 = vmatprep.subr.bf16.mxu0 0
    %243 = vmatpush1.bf16.msra.mxu0 0
    %244 = vmatprep.subr.bf16.mxu0 0
    %245 = vmatpush1.bf16.msra.mxu0 0
    %246 = vmatprep.subr.bf16.mxu0 0
    %247 = vmatpush1.bf16.msra.mxu0 0
    %248 = vmatprep.subr.bf16.mxu0 0
    %249 = vmatpush1.bf16.msra.mxu0 0
    %250 = vmatprep.mubr.bf16.mxu0 0
    %251 = vmatmul.mubr.bf16.gmra.mrb[0].mxu0 %v216
    %v252 = vpop.f32.mrb[0].mxu0
    %v253 = vadd.f32 0.0, %v252
    %v254 = vpop.f32.mrb[0].mxu0
    %v255 = vpop.f32.mrb[0].mxu0
    %v256 = vadd.f32 0.0, %v255
    %v257 = vpop.f32.mrb[0].mxu0
    %258 = vdwg.mxu0
    %v259 = vmul.f32 %v126, %v253
    %v260 = vmul.f32 %v131, %v256
    %v261 = vpack.c.bf16 %v260, %v259
    %262 = vmatprep.subr.bf16.mxu0 0
    %263 = vmatpush1.bf16.msra.mxu0 %v261
    %264 = vmatprep.subr.bf16.mxu0 0
    %265 = vmatpush1.bf16.msra.mxu0 0
    %266 = vmatprep.subr.bf16.mxu0 0
    %267 = vmatpush1.bf16.msra.mxu0 0
    %268 = vmatprep.subr.bf16.mxu0 0
    %269 = vmatpush1.bf16.msra.mxu0 0
    %270 = vmatprep.subr.bf16.mxu0 0
    %271 = vmatpush1.bf16.msra.mxu0 0
    %272 = vmatprep.subr.bf16.mxu0 0
    %273 = vmatpush1.bf16.msra.mxu0 0
    %274 = vmatprep.subr.bf16.mxu0 0
    %275 = vmatpush1.bf16.msra.mxu0 0
    %276 = vmatprep.subr.bf16.mxu0 0
    %277 = vmatpush1.bf16.msra.mxu0 0
    %278 = vmatprep.subr.bf16.mxu0 0
    %279 = vmatpush1.bf16.msra.mxu0 0
    %280 = vmatprep.subr.bf16.mxu0 0
    %281 = vmatpush1.bf16.msra.mxu0 0
    %282 = vmatprep.subr.bf16.mxu0 0
    %283 = vmatpush1.bf16.msra.mxu0 0
    %284 = vmatprep.subr.bf16.mxu0 0
    %285 = vmatpush1.bf16.msra.mxu0 0
    %286 = vmatprep.subr.bf16.mxu0 0
    %287 = vmatpush1.bf16.msra.mxu0 0
    %288 = vmatprep.subr.bf16.mxu0 0
    %289 = vmatpush1.bf16.msra.mxu0 0
    %290 = vmatprep.subr.bf16.mxu0 0
    %291 = vmatpush1.bf16.msra.mxu0 0
    %292 = vmatprep.subr.bf16.mxu0 0
    %293 = vmatpush1.bf16.msra.mxu0 0
    %294 = vmatprep.mubr.bf16.mxu0 0
    %295 = vmatmul.mubr.bf16.gmra.mrb[0].mxu0 %v143
    %v296 = vpop.f32.mrb[0].mxu0
    %v297 = vadd.f32 0.0, %v296
    %v298 = vpop.f32.mrb[0].mxu0
    %v299 = vpop.f32.mrb[0].mxu0
    %v300 = vadd.f32 0.0, %v299
    %v301 = vpop.f32.mrb[0].mxu0
    %302 = vdwg.mxu0
    %v303 = vmul.f32 %v126, %v297
    %v304 = vmul.f32 %v131, %v300
    %305 = vrot.lane.b32.xlu0 %v192, 96
    %v306 = vpop.permute.xlu0 %305
    %v308 = vadd.f32 %v303, %v306
    %v309 = vadd.f32 %v304, %v306
    %v310 = vmax.f32 %v308, 0.0
    %v311 = vmax.f32 %v309, 0.0
    %v312 = vld [vmem:[%s5] sm:$0xf]
    %v313 = vld [vmem:[%s5 + $0x4] sm:$0xf]
    %v314 = vld [vmem:[%s5 + $0x8] sm:$0xf]
    %v315 = vld [vmem:[%s5 + $0xc] sm:$0xf]
    %v316 = vpack.c.bf16 %v311, %v310
    %v321 = vunpack.c.l.b16 %v312
    %v322 = vunpack.c.l.b16 %v313
    %v323 = vunpack.c.l.b16 %v314
    %v324 = vunpack.c.l.b16 %v315
    %v325 = vpack.c.b16 %v322, %v321
    %v326 = vpack.c.b16 %v324, %v323
    %v330 = vsel %vm78, %v316, 0
    %332 = vmatprep.subr.bf16.mxu0 0
    %333 = vmatpush1.bf16.msra.mxu0 %v325
    %334 = vmatprep.subr.bf16.mxu0 0
    %335 = vmatpush1.bf16.msra.mxu0 %v326
    %336 = vmatprep.subr.bf16.mxu0 0
    %337 = vmatpush1.bf16.msra.mxu0 0
    %338 = vmatprep.subr.bf16.mxu0 0
    %339 = vmatpush1.bf16.msra.mxu0 0
    %340 = vmatprep.subr.bf16.mxu0 0
    %341 = vmatpush1.bf16.msra.mxu0 0
    %342 = vmatprep.subr.bf16.mxu0 0
    %343 = vmatpush1.bf16.msra.mxu0 0
    %344 = vmatprep.subr.bf16.mxu0 0
    %345 = vmatpush1.bf16.msra.mxu0 0
    %346 = vmatprep.subr.bf16.mxu0 0
    %347 = vmatpush1.bf16.msra.mxu0 0
    %348 = vmatprep.subr.bf16.mxu0 0
    %349 = vmatpush1.bf16.msra.mxu0 0
    %350 = vmatprep.subr.bf16.mxu0 0
    %351 = vmatpush1.bf16.msra.mxu0 0
    %352 = vmatprep.subr.bf16.mxu0 0
    %353 = vmatpush1.bf16.msra.mxu0 0
    %354 = vmatprep.subr.bf16.mxu0 0
    %355 = vmatpush1.bf16.msra.mxu0 0
    %356 = vmatprep.subr.bf16.mxu0 0
    %357 = vmatpush1.bf16.msra.mxu0 0
    %358 = vmatprep.subr.bf16.mxu0 0
    %359 = vmatpush1.bf16.msra.mxu0 0
    %360 = vmatprep.subr.bf16.mxu0 0
    %361 = vmatpush1.bf16.msra.mxu0 0
    %362 = vmatprep.subr.bf16.mxu0 0
    %363 = vmatpush1.bf16.msra.mxu0 0
    %364 = vmatprep.mubr.bf16.mxu0 0
    %365 = vmatmul.mubr.bf16.gmra.mrb[0].mxu0 %v330
    %v366 = vpop.f32.mrb[0].mxu0
    %v367 = vadd.f32 0.0, %v366
    %v368 = vpop.f32.mrb[0].mxu0
    %v369 = vpop.f32.mrb[0].mxu0
    %v370 = vadd.f32 0.0, %v369
    %v371 = vpop.f32.mrb[0].mxu0
    %372 = vdwg.mxu0
    %v373 = vmul.f32 %v126, %v367
    %v374 = vmul.f32 %v131, %v370
    %v375 = vpack.c.bf16 %v374, %v373
    %376 = vmatprep.subr.bf16.mxu0 0
    %377 = vmatpush1.bf16.msra.mxu0 %v375
    %378 = vmatprep.subr.bf16.mxu0 0
    %379 = vmatpush1.bf16.msra.mxu0 0
    %380 = vmatprep.subr.bf16.mxu0 0
    %381 = vmatpush1.bf16.msra.mxu0 0
    %382 = vmatprep.subr.bf16.mxu0 0
    %383 = vmatpush1.bf16.msra.mxu0 0
    %384 = vmatprep.subr.bf16.mxu0 0
    %385 = vmatpush1.bf16.msra.mxu0 0
    %386 = vmatprep.subr.bf16.mxu0 0
    %387 = vmatpush1.bf16.msra.mxu0 0
    %388 = vmatprep.subr.bf16.mxu0 0
    %389 = vmatpush1.bf16.msra.mxu0 0
    %390 = vmatprep.subr.bf16.mxu0 0
    %391 = vmatpush1.bf16.msra.mxu0 0
    %392 = vmatprep.subr.bf16.mxu0 0
    %393 = vmatpush1.bf16.msra.mxu0 0
    %394 = vmatprep.subr.bf16.mxu0 0
    %395 = vmatpush1.bf16.msra.mxu0 0
    %396 = vmatprep.subr.bf16.mxu0 0
    %397 = vmatpush1.bf16.msra.mxu0 0
    %398 = vmatprep.subr.bf16.mxu0 0
    %399 = vmatpush1.bf16.msra.mxu0 0
    %400 = vmatprep.subr.bf16.mxu0 0
    %401 = vmatpush1.bf16.msra.mxu0 0
    %402 = vmatprep.subr.bf16.mxu0 0
    %403 = vmatpush1.bf16.msra.mxu0 0
    %404 = vmatprep.subr.bf16.mxu0 0
    %405 = vmatpush1.bf16.msra.mxu0 0
    %406 = vmatprep.subr.bf16.mxu0 0
    %407 = vmatpush1.bf16.msra.mxu0 0
    %408 = vmatprep.mubr.bf16.mxu0 0
    %409 = vmatmul.mubr.bf16.gmra.mrb[0].mxu0 %v143
    %v410 = vpop.f32.mrb[0].mxu0
    %v411 = vadd.f32 0.0, %v410
    %v412 = vpop.f32.mrb[0].mxu0
    %v413 = vpop.f32.mrb[0].mxu0
    %v414 = vadd.f32 0.0, %v413
    %v415 = vpop.f32.mrb[0].mxu0
    %416 = vdwg.mxu0
    %v417 = vmul.f32 %v126, %v411
    %v418 = vmul.f32 %v131, %v414
    %419 = vrot.lane.b32.xlu0 %v192, 64
    %v420 = vpop.permute.xlu0 %419
    %v422 = vadd.f32 %v417, %v420
    %v423 = vadd.f32 %v418, %v420
    %v424 = vmax.f32 %v422, 0.0
    %v425 = vmax.f32 %v423, 0.0
    %v426 = vld [vmem:[#allocation4] sm:$0x3]
    %v428 = vsel %vm141, %v426, 0
    %430 = vmatprep.subr.mxu0 0.0
    %431 = vmatpush1.msra.mxu0 %v424
    %432 = vmatprep.subr.mxu0 0.0
    %433 = vmatpush1.msra.mxu0 %v425
    %434 = vmatprep.subr.mxu0 0.0
    %435 = vmatpush1.msra.mxu0 0.0
    %436 = vmatprep.subr.mxu0 0.0
    %437 = vmatpush1.msra.mxu0 0.0
    %438 = vmatprep.subr.mxu0 0.0
    %439 = vmatpush1.msra.mxu0 0.0
    %440 = vmatprep.subr.mxu0 0.0
    %441 = vmatpush1.msra.mxu0 0.0
    %442 = vmatprep.subr.mxu0 0.0
    %443 = vmatpush1.msra.mxu0 0.0
    %444 = vmatprep.subr.mxu0 0.0
    %445 = vmatpush1.msra.mxu0 0.0
    %446 = vmatprep.subr.mxu0 0.0
    %447 = vmatpush1.msra.mxu0 0.0
    %448 = vmatprep.subr.mxu0 0.0
    %449 = vmatpush1.msra.mxu0 0.0
    %450 = vmatprep.subr.mxu0 0.0
    %451 = vmatpush1.msra.mxu0 0.0
    %452 = vmatprep.subr.mxu0 0.0
    %453 = vmatpush1.msra.mxu0 0.0
    %454 = vmatprep.subr.mxu0 0.0
    %455 = vmatpush1.msra.mxu0 0.0
    %456 = vmatprep.subr.mxu0 0.0
    %457 = vmatpush1.msra.mxu0 0.0
    %458 = vmatprep.subr.mxu0 0.0
    %459 = vmatpush1.msra.mxu0 0.0
    %460 = vmatprep.subr.mxu0 0.0
    %461 = vmatpush1.msra.mxu0 0.0
    %462 = vmatprep.subr.mxu0 0.0
    %463 = vmatpush1.msra.mxu0 0.0
    %464 = vmatprep.subr.mxu0 0.0
    %465 = vmatpush1.msra.mxu0 0.0
    %466 = vmatprep.subr.mxu0 0.0
    %467 = vmatpush1.msra.mxu0 0.0
    %468 = vmatprep.subr.mxu0 0.0
    %469 = vmatpush1.msra.mxu0 0.0
    %470 = vmatprep.subr.mxu0 0.0
    %471 = vmatpush1.msra.mxu0 0.0
    %472 = vmatprep.subr.mxu0 0.0
    %473 = vmatpush1.msra.mxu0 0.0
    %474 = vmatprep.subr.mxu0 0.0
    %475 = vmatpush1.msra.mxu0 0.0
    %476 = vmatprep.subr.mxu0 0.0
    %477 = vmatpush1.msra.mxu0 0.0
    %478 = vmatprep.subr.mxu0 0.0
    %479 = vmatpush1.msra.mxu0 0.0
    %480 = vmatprep.subr.mxu0 0.0
    %481 = vmatpush1.msra.mxu0 0.0
    %482 = vmatprep.subr.mxu0 0.0
    %483 = vmatpush1.msra.mxu0 0.0
    %484 = vmatprep.subr.mxu0 0.0
    %485 = vmatpush1.msra.mxu0 0.0
    %486 = vmatprep.subr.mxu0 0.0
    %487 = vmatpush1.msra.mxu0 0.0
    %488 = vmatprep.subr.mxu0 0.0
    %489 = vmatpush1.msra.mxu0 0.0
    %490 = vmatprep.subr.mxu0 0.0
    %491 = vmatpush1.msra.mxu0 0.0
    %492 = vmatprep.subr.mxu0 0.0
    %493 = vmatpush1.msra.mxu0 0.0
    %494 = vmatprep.mubr.f32.mxu0 0.0
    %495 = vmatmul.mubr.f32.gmra.mrb[0].mxu0 %v428
    %v496 = vpop.f32.mrb[0].mxu0
    %v497 = vadd.f32 0.0, %v496
    %v498 = vpop.f32.mrb[0].mxu0
    %499 = vdwg.mxu0
    %v500 = vld [vmem:[%s6] sm:$0xff]
    %v501 = vld [vmem:[%s6 + $0x8] sm:$0xff]
    %502 = vrot.lane.b32.xlu0 %v192, 48
    %v503 = vpop.permute.xlu0 %502
    %v506 = vsel %vm141, %v497, 0
    %508 = vmatprep.subr.mxu0 0.0
    %509 = vmatpush1.msra.mxu0 %v500
    %510 = vmatprep.subr.mxu0 0.0
    %511 = vmatpush1.msra.mxu0 %v501
    %512 = vmatprep.subr.mxu0 0.0
    %513 = vmatpush1.msra.mxu0 0.0
    %514 = vmatprep.subr.mxu0 0.0
    %515 = vmatpush1.msra.mxu0 0.0
    %516 = vmatprep.subr.mxu0 0.0
    %517 = vmatpush1.msra.mxu0 0.0
    %518 = vmatprep.subr.mxu0 0.0
    %519 = vmatpush1.msra.mxu0 0.0
    %520 = vmatprep.subr.mxu0 0.0
    %521 = vmatpush1.msra.mxu0 0.0
    %522 = vmatprep.subr.mxu0 0.0
    %523 = vmatpush1.msra.mxu0 0.0
    %524 = vmatprep.subr.mxu0 0.0
    %525 = vmatpush1.msra.mxu0 0.0
    %526 = vmatprep.subr.mxu0 0.0
    %527 = vmatpush1.msra.mxu0 0.0
    %528 = vmatprep.subr.mxu0 0.0
    %529 = vmatpush1.msra.mxu0 0.0
    %530 = vmatprep.subr.mxu0 0.0
    %531 = vmatpush1.msra.mxu0 0.0
    %532 = vmatprep.subr.mxu0 0.0
    %533 = vmatpush1.msra.mxu0 0.0
    %534 = vmatprep.subr.mxu0 0.0
    %535 = vmatpush1.msra.mxu0 0.0
    %536 = vmatprep.subr.mxu0 0.0
    %537 = vmatpush1.msra.mxu0 0.0
    %538 = vmatprep.subr.mxu0 0.0
    %539 = vmatpush1.msra.mxu0 0.0
    %540 = vmatprep.subr.mxu0 0.0
    %541 = vmatpush1.msra.mxu0 0.0
    %542 = vmatprep.subr.mxu0 0.0
    %543 = vmatpush1.msra.mxu0 0.0
    %544 = vmatprep.subr.mxu0 0.0
    %545 = vmatpush1.msra.mxu0 0.0
    %546 = vmatprep.subr.mxu0 0.0
    %547 = vmatpush1.msra.mxu0 0.0
    %548 = vmatprep.subr.mxu0 0.0
    %549 = vmatpush1.msra.mxu0 0.0
    %550 = vmatprep.subr.mxu0 0.0
    %551 = vmatpush1.msra.mxu0 0.0
    %552 = vmatprep.subr.mxu0 0.0
    %553 = vmatpush1.msra.mxu0 0.0
    %554 = vmatprep.subr.mxu0 0.0
    %555 = vmatpush1.msra.mxu0 0.0
    %556 = vmatprep.subr.mxu0 0.0
    %557 = vmatpush1.msra.mxu0 0.0
    %558 = vmatprep.subr.mxu0 0.0
    %559 = vmatpush1.msra.mxu0 0.0
    %560 = vmatprep.subr.mxu0 0.0
    %561 = vmatpush1.msra.mxu0 0.0
    %562 = vmatprep.subr.mxu0 0.0
    %563 = vmatpush1.msra.mxu0 0.0
    %564 = vmatprep.subr.mxu0 0.0
    %565 = vmatpush1.msra.mxu0 0.0
    %566 = vmatprep.subr.mxu0 0.0
    %567 = vmatpush1.msra.mxu0 0.0
    %568 = vmatprep.subr.mxu0 0.0
    %569 = vmatpush1.msra.mxu0 0.0
    %570 = vmatprep.subr.mxu0 0.0
    %571 = vmatpush1.msra.mxu0 0.0
    %572 = vmatprep.mubr.f32.mxu0 0.0
    %573 = vmatmul.mubr.f32.gmra.mrb[0].mxu0 %v506
    %v574 = vpop.f32.mrb[0].mxu0
    %v575 = vadd.f32 %v503, %v574
    %v576 = vpop.f32.mrb[0].mxu0
    %577 = vdwg.mxu0
    %v578 = vxor.u32 %v575, 2147483648
    %v579 = vmul.f32 %v578, 1.442695
    %v580 = vpow.pop %v579
    %v581 = vadd.f32 %v580, 1.0
    %v582 = vrcp.pop %v581
    %v583 = vmul.f32 1.0, %v582
    %vm584 = vcmask 1024
    %585 = vst.msk [vmem:[%s8] sm:$0x3] %vm584, %v583
    // Predicated region
    $region42: #{tpu_custom_call.1} parent=1 // pred_check
      _
    $region43: #{tpu_custom_call.1} parent=1 // pred_check_branch
      %587 = sbr.rel (0) target = $region45
    $region44: #{tpu_custom_call.1} parent=1 // pred_region
      _
    $region45: #{tpu_custom_call.1} parent=1 // pred_fallthru
      _
    // Predicated region
    $region46: #{tpu_custom_call.1} parent=1 // pred_check
      _
    $region47: #{tpu_custom_call.1} parent=1 // pred_check_branch
      %589 = sbr.rel (0) target = $region49
    $region48: #{tpu_custom_call.1} parent=1 // pred_region
      _
    $region49: #{tpu_custom_call.1} parent=1 // pred_fallthru
      _
    %590 = vsyncpa [#allocation3], 1
    %591 = vsyncpa [#allocation5], 1

</llo_original>
